<compile_context>
chip_gen: v5e
topology: v5e:2x2
jax: 0.10.0
libtpu: 0.0.40
codegen_flags: <defaults>
</compile_context>

<pallas_src>
import jax
import jax.numpy as jnp
from jax.experimental import pallas as pl
from jax.experimental.pallas import tpu as pltpu


def _haar_kernel(x_ref, m_ref, o_ref):
    """One grid step: tile_c channel planes of one batch element.

    x_ref: (tile_c*H2, 2*W)    each row = [even image row | odd image row] (contiguous view)
    m_ref: (Wc, 2*Wc2)         0.25-scaled column-pair combine matrix [S | D]
    o_ref: (4, tile_c*H2, W2)  the four Haar bands for those planes
    """
    W = x_ref.shape[-1] // 2
    Wc = m_ref.shape[0]
    Wc2 = Wc // 2
    W2 = o_ref.shape[-1]
    n_chunks = W2 // Wc2
    dt = o_ref.dtype

    m = m_ref[...]                                   # hoisted; reused by every chunk
    for k in range(n_chunks):                        # static unroll; n_chunks ~ W2/128
        even = x_ref[:, k * Wc:(k + 1) * Wc].astype(jnp.float32)        # rows 2i
        odd = x_ref[:, W + k * Wc:W + (k + 1) * Wc].astype(jnp.float32)  # rows 2i+1
        rs = even + odd                              # lanes (2j, 2j+1): a+c, b+d
        rd = even - odd                              # lanes (2j, 2j+1): a-c, b-d
        res_s = jnp.dot(rs, m, preferred_element_type=jnp.float32)      # [LL | b1]
        res_d = jnp.dot(rd, m, preferred_element_type=jnp.float32)      # [b2 | b3]
        lo, hi = k * Wc2, (k + 1) * Wc2
        o_ref[0, :, lo:hi] = res_s[:, :Wc2].astype(dt)   # (a+b+c+d)/4
        o_ref[1, :, lo:hi] = res_s[:, Wc2:].astype(dt)   # (a-b+c-d)/4
        o_ref[2, :, lo:hi] = res_d[:, :Wc2].astype(dt)   # (a+b-c-d)/4
        o_ref[3, :, lo:hi] = res_d[:, Wc2:].astype(dt)   # (a-b-c+d)/4


def _sublane_multiple(dtype):
    # f32 -> 8, bf16 -> 16, int8/fp8 -> 32 (sub-32-bit dtypes pack along sublanes).
    return max(8, 32 // jnp.dtype(dtype).itemsize)


def _pick_chunk_w2(W2):
    """Output-column chunk width for the MXU combine (keep N <= 256, K <= 256)."""
    if W2 <= 128:
        return W2
    best = max(d for d in range(1, 129) if W2 % d == 0)
    return best if best >= 32 else W2


def _is_v7x():
    try:
        return "v7" in jax.devices()[0].device_kind.lower()
    except Exception:
        return False


def _pick_tile_c(B, C, H2, plane_bytes, sublane_mult, target_bytes=8 << 20):
    """Largest legal channel tile whose input block is ~<= target_bytes."""
    def valid(t):
        return C % t == 0 and (t == C or (t * H2) % sublane_mult == 0)

    divisors = [t for t in range(1, C + 1) if valid(t)]
    fitting = [t for t in divisors if t * plane_bytes <= target_bytes]
    tile = max(fitting) if fitting else min(divisors)

    # Megacore sharding of parallel grid axes only exists on v7x (2 TC/chip); elsewhere
    # shrinking the tile just adds per-step overhead.
    if _is_v7x() and B * (C // tile) < 4:
        smaller = [t for t in divisors if t < tile and B * (C // t) >= 4]
        if not smaller:
            smaller = [t for t in divisors if t < tile and B * (C // t) >= 2]
        if smaller:
            tile = max(smaller)
    return tile


@jax.jit
def haar_wavelet_forward(x):
    """HaarWavelet.forward(x, rev=False). x: (B, C, H, W) NCHW, H and W even."""
    B, C, H, W = x.shape
    assert H % 2 == 0 and W % 2 == 0, "HaarWavelet forward requires even H and W"
    H2, W2 = H // 2, W // 2
    dt = x.dtype
    itemsize = jnp.dtype(dt).itemsize

    tile_c = _pick_tile_c(B, C, H2, H * W * itemsize, _sublane_multiple(dt))
    tile_n = tile_c * H2
    grid = (B, C // tile_c)

    # Per-chunk column-pair combine matrix with the 0.25 scale folded in:
    # column j (< Wc2):  +0.25 at rows 2j, 2j+1         -> sum of the column pair
    # column Wc2 + j:    +0.25 at row 2j, -0.25 at 2j+1 -> difference of the column pair
    Wc2 = _pick_chunk_w2(W2)
    Wc = 2 * Wc2
    eye = jnp.eye(Wc2, dtype=jnp.float32)
    s_mat = jnp.kron(eye, jnp.array([[1.0], [1.0]], jnp.float32))
    d_mat = jnp.kron(eye, jnp.array([[1.0], [-1.0]], jnp.float32))
    m_mat = jnp.concatenate([s_mat, d_mat], axis=1) * 0.25        # (Wc, 2*Wc2)

    # Contiguous (free) view: each row holds [even image row | odd image row].
    x_view = x.reshape(B, C * H2, 2 * W)

    in_block_bytes = tile_n * 2 * W * itemsize
    out_block_bytes = 4 * tile_n * W2 * itemsize
    const_bytes = Wc * 2 * Wc2 * 4
    vmem_need = 2 * (in_block_bytes + out_block_bytes) + 2 * const_bytes + (4 << 20)
    vmem_limit = int(min(max(vmem_need, 16 << 20), 48 << 20))     # <= 48 MiB (v7x-safe)

    out = pl.pallas_call(
        _haar_kernel,
        out_shape=jax.ShapeDtypeStruct((B, 4, C * H2, W2), dt),
        grid=grid,
        in_specs=[
            pl.BlockSpec((None, tile_n, 2 * W), lambda b, ci: (b, ci, 0)),
            pl.BlockSpec((Wc, 2 * Wc2), lambda b, ci: (0, 0)),
        ],
        out_specs=pl.BlockSpec((None, 4, tile_n, W2), lambda b, ci: (b, 0, ci, 0)),
        compiler_params=pltpu.CompilerParams(
            dimension_semantics=("parallel", "parallel"),
            vmem_limit_bytes=vmem_limit,
        ),
    )(x_view, m_mat)

    # (B, 4, C*H2, W2) -> (B, 4*C, H2, W2): contiguous reshape, free (matches the
    # reshape/transpose(1,2)/reshape in the PyTorch forward).
    return out.reshape(B, 4 * C, H2, W2)


def _reference(x):
    # Pure-JAX reference of the same forward (for self-check).
    B, C, H, W = x.shape
    a = x[:, :, 0::2, 0::2]
    b = x[:, :, 0::2, 1::2]
    c = x[:, :, 1::2, 0::2]
    d = x[:, :, 1::2, 1::2]
    bands = jnp.stack(
        [a + b + c + d, a - b + c - d, a + b - c - d, a - b - c + d], axis=1
    ) * 0.25
    return bands.reshape(B, 4 * C, H // 2, W // 2)


if __name__ == "__main__":
    key = jax.random.PRNGKey(0)

    # Small shape consistent with the module (single-chunk path).
    x = jax.random.normal(key, (2, 4, 16, 16), dtype=jnp.float32)
    out = jax.block_until_ready(haar_wavelet_forward(x))
    ref = _reference(x)
    assert out.shape == (2, 16, 8, 8), out.shape
    assert jnp.allclose(out, ref, atol=1e-5, rtol=1e-5), float(jnp.max(jnp.abs(out - ref)))

    # Wider shape (W2 % 128 == 0) exercises the chunked, lane-aligned combine path.
    x2 = jax.random.normal(jax.random.PRNGKey(0), (1, 2, 8, 512), dtype=jnp.float32)
    out2 = jax.block_until_ready(haar_wavelet_forward(x2))
    ref2 = _reference(x2)
    assert out2.shape == (1, 8, 4, 256), out2.shape
    assert jnp.allclose(out2, ref2, atol=1e-5, rtol=1e-5), float(jnp.max(jnp.abs(out2 - ref2)))

    print("KERNEL_OK")
</pallas_src>

<mosaic_0001>
module attributes {stable_mosaic.version = 11 : i64} {
  func.func @_haar_kernel(%arg0: i32, %arg1: i32, %arg2: memref<1x32x32xf32, #tpu.memory_space<vmem>>, %arg3: memref<16x16xf32, #tpu.memory_space<vmem>>, %arg4: memref<1x4x32x8xf32, #tpu.memory_space<vmem>>) attributes {dimension_semantics = [#tpu.dimension_semantics<parallel>, #tpu.dimension_semantics<parallel>], iteration_bounds = array<i64: 2, 1>, scalar_prefetch = 0 : i64, scratch_operands = 0 : i64, tpu.core_type = #tpu.core_type<tc>, window_params = [{transform_indices = @transform_0, window_bounds = array<i64: 1, 32, 32>}, {pipeline_mode = #tpu.pipeline_mode<synchronous>, transform_indices = @transform_1, window_bounds = array<i64: 16, 16>}, {transform_indices = @transform_2, window_bounds = array<i64: 1, 4, 32, 8>}]} {
    %c0 = arith.constant 0 : index
    %c0_0 = arith.constant 0 : index
    %0 = vector.load %arg3[%c0, %c0_0] : memref<16x16xf32, #tpu.memory_space<vmem>>, vector<16x16xf32>
    %c0_1 = arith.constant 0 : index
    %c0_2 = arith.constant 0 : index
    %c0_3 = arith.constant 0 : index
    %1 = vector.load %arg2[%c0_1, %c0_2, %c0_3] : memref<1x32x32xf32, #tpu.memory_space<vmem>>, vector<1x32x16xf32>
    %2 = vector.shape_cast %1 : vector<1x32x16xf32> to vector<32x16xf32>
    %c0_4 = arith.constant 0 : index
    %c0_5 = arith.constant 0 : index
    %c16 = arith.constant 16 : index
    %3 = vector.load %arg2[%c0_4, %c0_5, %c16] : memref<1x32x32xf32, #tpu.memory_space<vmem>>, vector<1x32x16xf32>
    %4 = vector.shape_cast %3 : vector<1x32x16xf32> to vector<32x16xf32>
    %5 = arith.addf %2, %4 : vector<32x16xf32>
    %6 = arith.subf %2, %4 : vector<32x16xf32>
    %cst = arith.constant dense<0.000000e+00> : vector<32x16xf32>
    %7 = tpu.matmul %5, %0, %cst {dimension_numbers = #tpu.dot_dimension_numbers<[1], [0], [0], [1], [0, 0, 1, 1], [], []>} : vector<32x16xf32>, vector<16x16xf32>, vector<32x16xf32> -> vector<32x16xf32>
    %cst_6 = arith.constant dense<0.000000e+00> : vector<32x16xf32>
    %8 = tpu.matmul %6, %0, %cst_6 {dimension_numbers = #tpu.dot_dimension_numbers<[1], [0], [0], [1], [0, 0, 1, 1], [], []>} : vector<32x16xf32>, vector<16x16xf32>, vector<32x16xf32> -> vector<32x16xf32>
    %9 = vector.extract_strided_slice %7 {offsets = [0, 0], sizes = [32, 8], strides = [1, 1]} : vector<32x16xf32> to vector<32x8xf32>
    %c0_7 = arith.constant 0 : index
    %c0_8 = arith.constant 0 : index
    %c0_9 = arith.constant 0 : index
    %c0_10 = arith.constant 0 : index
    %10 = vector.load %arg4[%c0_7, %c0_8, %c0_9, %c0_10] : memref<1x4x32x8xf32, #tpu.memory_space<vmem>>, vector<1x1x32x8xf32>
    %11 = vector.shape_cast %10 : vector<1x1x32x8xf32> to vector<32x8xf32>
    %12 = vector.shape_cast %9 : vector<32x8xf32> to vector<1x1x32x8xf32>
    tpu.vector_store %arg4[%c0_7, %c0_8, %c0_9, %c0_10], %12 {strides = array<i32>} : memref<1x4x32x8xf32, #tpu.memory_space<vmem>>, vector<1x1x32x8xf32>,
    %13 = vector.extract_strided_slice %7 {offsets = [0, 8], sizes = [32, 8], strides = [1, 1]} : vector<32x16xf32> to vector<32x8xf32>
    %c0_11 = arith.constant 0 : index
    %c1 = arith.constant 1 : index
    %c0_12 = arith.constant 0 : index
    %c0_13 = arith.constant 0 : index
    %14 = vector.load %arg4[%c0_11, %c1, %c0_12, %c0_13] : memref<1x4x32x8xf32, #tpu.memory_space<vmem>>, vector<1x1x32x8xf32>
    %15 = vector.shape_cast %14 : vector<1x1x32x8xf32> to vector<32x8xf32>
    %16 = vector.shape_cast %13 : vector<32x8xf32> to vector<1x1x32x8xf32>
    tpu.vector_store %arg4[%c0_11, %c1, %c0_12, %c0_13], %16 {strides = array<i32>} : memref<1x4x32x8xf32, #tpu.memory_space<vmem>>, vector<1x1x32x8xf32>,
    %17 = vector.extract_strided_slice %8 {offsets = [0, 0], sizes = [32, 8], strides = [1, 1]} : vector<32x16xf32> to vector<32x8xf32>
    %c0_14 = arith.constant 0 : index
    %c2 = arith.constant 2 : index
    %c0_15 = arith.constant 0 : index
    %c0_16 = arith.constant 0 : index
    %18 = vector.load %arg4[%c0_14, %c2, %c0_15, %c0_16] : memref<1x4x32x8xf32, #tpu.memory_space<vmem>>, vector<1x1x32x8xf32>
    %19 = vector.shape_cast %18 : vector<1x1x32x8xf32> to vector<32x8xf32>
    %20 = vector.shape_cast %17 : vector<32x8xf32> to vector<1x1x32x8xf32>
    tpu.vector_store %arg4[%c0_14, %c2, %c0_15, %c0_16], %20 {strides = array<i32>} : memref<1x4x32x8xf32, #tpu.memory_space<vmem>>, vector<1x1x32x8xf32>,
    %21 = vector.extract_strided_slice %8 {offsets = [0, 8], sizes = [32, 8], strides = [1, 1]} : vector<32x16xf32> to vector<32x8xf32>
    %c0_17 = arith.constant 0 : index
    %c3 = arith.constant 3 : index
    %c0_18 = arith.constant 0 : index
    %c0_19 = arith.constant 0 : index
    %22 = vector.load %arg4[%c0_17, %c3, %c0_18, %c0_19] : memref<1x4x32x8xf32, #tpu.memory_space<vmem>>, vector<1x1x32x8xf32>
    %23 = vector.shape_cast %22 : vector<1x1x32x8xf32> to vector<32x8xf32>
    %24 = vector.shape_cast %21 : vector<32x8xf32> to vector<1x1x32x8xf32>
    tpu.vector_store %arg4[%c0_17, %c3, %c0_18, %c0_19], %24 {strides = array<i32>} : memref<1x4x32x8xf32, #tpu.memory_space<vmem>>, vector<1x1x32x8xf32>,
    return
  }
  func.func @transform_0(%arg0: i32, %arg1: i32) -> (i32, i32, i32) {
    %c0_i32 = arith.constant 0 : i32
    %c0_i32_0 = arith.constant 0 : i32
    return %arg0, %arg1, %c0_i32 : i32, i32, i32
  }
  func.func @transform_1(%arg0: i32, %arg1: i32) -> (i32, i32) {
    %c0_i32 = arith.constant 0 : i32
    %c0_i32_0 = arith.constant 0 : i32
    %c0_i32_1 = arith.constant 0 : i32
    return %c0_i32, %c0_i32_0 : i32, i32
  }
  func.func @transform_2(%arg0: i32, %arg1: i32) -> (i32, i32, i32, i32) {
    %c0_i32 = arith.constant 0 : i32
    %c0_i32_0 = arith.constant 0 : i32
    %c0_i32_1 = arith.constant 0 : i32
    return %arg0, %c0_i32, %arg1, %c0_i32_0 : i32, i32, i32, i32
  }
}

</mosaic_0001>

<llo_original>
// kernel: haar_wavelet_forward.1
$region0: #{haar_wavelet_forward.1}
  #allocation0 [shape = 'u32[]', space=smem, size = 0x4, offset = 0x4, fixed_abs, tag = 'smem constant byte address 0x4 - core index']
  #allocation1 [shape = 'u32[72,128]{1,0:T(1,128)}', space=vmem, size = 0x9000, scoped, tag = 'internal scratch']
  %s0 = inlined_call_operand.vmem [shape: f32[2,32,32], index: 0, kind: input, shape index: {}]
  %s1 = inlined_call_operand.vmem [shape: f32[16,16], index: 1, kind: input, shape index: {}]
  %s2 = inlined_call_operand.vmem [shape: f32[2,4,32,8], index: 2, kind: output, shape index: {}]
  %s3 = sld [smem:[#allocation0]]
  $region41: #{haar_wavelet_forward.1} parent=0
    _
  %s5 = ssub.s32 1, %s3
  %s6 = scalar_select 0, %s5, %s3
  loop: start=0, step=1, limit=4
  $region2: #{haar_wavelet_forward.1} parent=0 // loop_pre_header
    _
  $region3: #{haar_wavelet_forward.1} parent=0 // loop_header
    %s8 = sphi 0, %s12
    %p9 = scmp.ge.s32.totalorder %s8, 4
    %s15 = sphi 0, %s27
    %s16 = sphi 0, %s23
    %s17 = sphi 0, %s15
    %s18 = sphi 0, %s16
    %s19 = sphi 0, %s17
    %s20 = sphi 0, %s18
    %s32 = sphi 0, %s34
    %s35 = sphi 0, %s32
    %s36 = sphi 0, %s35
    %s52 = sphi 0, %s36
    %s56 = sphi 0, %s56
    %s58 = sphi 0, %s56
    %s59 = sphi 0, %s58
    %s73 = sphi 0, %s59
    %s81 = sphi 0, %s83
    %s84 = sphi 0, %s81
    %s85 = sphi 0, %s84
    %s101 = sphi 0, %s85
  $region4: #{haar_wavelet_forward.1} parent=0 // loop_header_branch
    %11 = sbr.rel (%p9) target = $region8
  $region5: #{haar_wavelet_forward.1} parent=0 // loop_body
    %s13 = ssub.s32 %s8, 1
    %s14 = ssub.s32 %s8, 2
    %s21 = sadd.s32 1, %s16
    %p22 = scmp.ge.s32.totalorder %s21, 1
    %s23 = scalar_select %p22, 0, %s21
    %s24 = sadd.s32 1, %s15
    %s25 = scalar_select %p22, %s24, %s15
    %p26 = scmp.ge.s32.totalorder %s25, 2
    %s27 = scalar_select %p26, 0, %s25
    %s28 = ssub.s32 %s15, %s27
    %s29 = ssub.s32 %s16, %s23
    %s30 = sor.u32 %s28, %s29
    %p31 = scmp.eq.s32.totalorder %s30, 0
    %s33 = sadd.s32 %s32, 1
    %s34 = scalar_select %p31, %s32, %s33
    %p37 = pneg %p31
    %p38 = scmp.eq.s32.totalorder %s8, 1
    %p39 = por %p37, %p38
    %p40 = scmp.ne.s32.totalorder %s32, %s35
    %p41 = scmp.eq.s32.totalorder %s8, 0
    %p42 = por %p40, %p41
    %p43 = scmp.ne.s32.totalorder %s32, %s35
    %p44 = scmp.eq.s32.totalorder %s13, 1
    %p45 = por %p43, %p44
    %p46 = scmp.ne.s32.totalorder %s35, %s36
    %p47 = scmp.eq.s32.totalorder %s13, 0
    %p48 = por %p46, %p47
    %p49 = scmp.ne.s32.totalorder %s35, %s36
    %p50 = scmp.eq.s32.totalorder %s14, 1
    %p51 = por %p49, %p50
    %p53 = scmp.ne.s32.totalorder %s36, %s52
    %p54 = scmp.eq.s32.totalorder %s14, 0
    %p55 = por %p53, %p54
    %s57 = sadd.s32 %s56, 1
    %p60 = scmp.eq.s32.totalorder %s8, 1
    %p61 = scmp.ne.s32.totalorder %s56, %s58
    %p62 = scmp.eq.s32.totalorder %s8, 0
    %p63 = por %p61, %p62
    %p64 = scmp.ne.s32.totalorder %s56, %s58
    %p65 = scmp.eq.s32.totalorder %s13, 1
    %p66 = por %p64, %p65
    %p67 = scmp.ne.s32.totalorder %s58, %s59
    %p68 = scmp.eq.s32.totalorder %s13, 0
    %p69 = por %p67, %p68
    %p70 = scmp.ne.s32.totalorder %s58, %s59
    %p71 = scmp.eq.s32.totalorder %s14, 1
    %p72 = por %p70, %p71
    %p74 = scmp.ne.s32.totalorder %s59, %s73
    %p75 = scmp.eq.s32.totalorder %s14, 0
    %p76 = por %p74, %p75
    %s77 = ssub.s32 %s15, %s27
    %s78 = ssub.s32 %s16, %s23
    %s79 = sor.u32 %s77, %s78
    %p80 = scmp.eq.s32.totalorder %s79, 0
    %s82 = sadd.s32 %s81, 1
    %s83 = scalar_select %p80, %s81, %s82
    %p86 = pneg %p80
    %p87 = scmp.eq.s32.totalorder %s8, 1
    %p88 = por %p86, %p87
    %p89 = scmp.ne.s32.totalorder %s81, %s84
    %p90 = scmp.eq.s32.totalorder %s8, 0
    %p91 = por %p89, %p90
    %p92 = scmp.ne.s32.totalorder %s81, %s84
    %p93 = scmp.eq.s32.totalorder %s13, 1
    %p94 = por %p92, %p93
    %p95 = scmp.ne.s32.totalorder %s84, %s85
    %p96 = scmp.eq.s32.totalorder %s13, 0
    %p97 = por %p95, %p96
    %p98 = scmp.ne.s32.totalorder %s84, %s85
    %p99 = scmp.eq.s32.totalorder %s14, 1
    %p100 = por %p98, %p99
    %p102 = scmp.ne.s32.totalorder %s85, %s101
    %p103 = scmp.eq.s32.totalorder %s14, 0
    %p104 = por %p102, %p103
    %p105 = scmp.le.s32.totalorder 1, %s8
    %p106 = scmp.lt.s32.totalorder %s8, 3
    %p107 = pnand %p105, %p106
    %p108 = pneg %p107
    // Predicated region
    $region9: #{haar_wavelet_forward.1} parent=5 // pred_check
      _
    $region10: #{haar_wavelet_forward.1} parent=5 // pred_check_branch
      %110 = sbr.rel (%p107) target = $region12
    $region11: #{haar_wavelet_forward.1} parent=5 // pred_region
      %s111 = ssub.s32 %s8, 1
      // Predicated region
      $region13: #{haar_wavelet_forward.1} parent=11 // pred_check
        %p112 = pneg %p69
      $region14: #{haar_wavelet_forward.1} parent=11 // pred_check_branch
        %114 = sbr.rel (%p112) target = $region16
      $region15: #{haar_wavelet_forward.1} parent=11 // pred_region
        _
      $region16: #{haar_wavelet_forward.1} parent=11 // pred_fallthru
        _
    $region12: #{haar_wavelet_forward.1} parent=5 // pred_fallthru
      _
    %p115 = scmp.lt.s32.totalorder %s8, 2
    // Predicated region
    $region17: #{haar_wavelet_forward.1} parent=5 // pred_check
      %p116 = pneg %p115
    $region18: #{haar_wavelet_forward.1} parent=5 // pred_check_branch
      %118 = sbr.rel (%p116) target = $region20
    $region19: #{haar_wavelet_forward.1} parent=5 // pred_region
      // Predicated region
      $region21: #{haar_wavelet_forward.1} parent=19 // pred_check
        %p119 = pneg %p42
      $region22: #{haar_wavelet_forward.1} parent=19 // pred_check_branch
        %121 = sbr.rel (%p119) target = $region24
      $region23: #{haar_wavelet_forward.1} parent=19 // pred_region
        %s122 = smul.u32 4, %s16
        %p123 = scmp.lt.s32.totalorder %s15, 1
        %s124 = scalar_select %p123, %s15, 1
        %p125 = scmp.lt.s32.totalorder %s122, 3
        %s126 = scalar_select %p125, %s122, 3
        %s127 = smul.addr %s124, 4
        %s128 = sadd.s32 %s126, %s127
        %s129 = smul.addr %s128, 8
        %s130 = scalar_lea.vmem %s0, %s129
        %s131 = smul.u32 4, %s16
      $region24: #{haar_wavelet_forward.1} parent=19 // pred_fallthru
        _
    $region20: #{haar_wavelet_forward.1} parent=5 // pred_fallthru
      _
    %p132 = scmp.le.s32.totalorder 1, %s8
    %p133 = scmp.lt.s32.totalorder %s8, 3
    %p134 = pnand %p132, %p133
    %p135 = pneg %p134
    // Predicated region
    $region25: #{haar_wavelet_forward.1} parent=5 // pred_check
      _
    $region26: #{haar_wavelet_forward.1} parent=5 // pred_check_branch
      %137 = sbr.rel (%p134) target = $region28
    $region27: #{haar_wavelet_forward.1} parent=5 // pred_region
      %s138 = ssub.s32 %s8, 1
      %s139 = smul.u32 4, %s18
      %p140 = scmp.lt.s32.totalorder %s17, 1
      %s141 = scalar_select %p140, %s17, 1
      %p142 = scmp.lt.s32.totalorder %s139, 3
      %s143 = scalar_select %p142, %s139, 3
      %s144 = smul.addr %s141, 4
      %s145 = sadd.s32 %s143, %s144
      %s146 = smul.addr %s145, 8
      %s147 = scalar_lea.vmem %s0, %s146
      %p148 = pneg %p48
      %p149 = pneg %p45
      %p150 = pneg %p69
      %p151 = pneg %p66
      %p152 = pneg %p97
      %p153 = pneg %p94
      %s154 = smul.u32 4, %s18
      %p155 = scmp.lt.s32.totalorder %s17, 1
      %s156 = scalar_select %p155, %s17, 1
      %p157 = scmp.lt.s32.totalorder %s154, 3
      %s158 = scalar_select %p157, %s154, 3
      %s159 = smul.addr %s156, 16
      %s160 = sadd.s32 %s158, %s159
      %s161 = smul.addr %s160, 8
      %s162 = scalar_lea.vmem %s2, %s161
      %s163 = smul.u32 4, %s18
      %p164 = scmp.lt.s32.totalorder %s17, 1
      %s165 = scalar_select %p164, %s17, 1
      %p166 = scmp.lt.s32.totalorder %s163, 3
      %s167 = scalar_select %p166, %s163, 3
      %s168 = smul.addr %s165, 4
      %s169 = sadd.s32 %s167, %s168
      %s170 = smul.addr %s169, 8
      %s171 = scalar_lea.vmem %s0, %s170
      %s172 = smul.u32 4, %s18
      %s173 = smul.u32 4, %s18
      %p174 = scmp.lt.s32.totalorder %s17, 1
      %s175 = scalar_select %p174, %s17, 1
      %p176 = scmp.lt.s32.totalorder %s173, 3
      %s177 = scalar_select %p176, %s173, 3
      %s178 = smul.addr %s175, 16
      %s179 = sadd.s32 %s177, %s178
      %s180 = smul.addr %s179, 8
      %s181 = scalar_lea.vmem %s2, %s180
      %s182 = smul.u32 4, %s18
      %v183 = vld [vmem:[%s1] sm:$0xff]
      %v184 = vld [vmem:[%s1 + $0x8] sm:$0xff]
      %v185 = vld [vmem:[%s171] sm:$0xff]
      %v186 = vld [vmem:[%s171 + $0x8] sm:$0xff]
      %v187 = vld [vmem:[%s171 + $0x10] sm:$0xff]
      %v188 = vld [vmem:[%s171 + $0x18] sm:$0xff]
      %193 = vrot.lane.b32.xlu0 %v185, 112
      %v194 = vpop.permute.xlu0 %193
      %195 = vrot.lane.b32.xlu0 %v186, 112
      %v196 = vpop.permute.xlu0 %195
      %197 = vrot.lane.b32.xlu0 %v187, 112
      %v198 = vpop.permute.xlu0 %197
      %199 = vrot.lane.b32.xlu0 %v188, 112
      %v200 = vpop.permute.xlu0 %199
      %v205 = vadd.f32 %v185, %v194
      %v206 = vadd.f32 %v186, %v196
      %v207 = vadd.f32 %v187, %v198
      %v208 = vadd.f32 %v188, %v200
      %v209 = vsub.f32 %v185, %v194
      %v210 = vsub.f32 %v186, %v196
      %v211 = vsub.f32 %v187, %v198
      %v212 = vsub.f32 %v188, %v200
      %vm213 = vcmask 130048
      %v215 = vsel %vm213, %v205, 0
      %v218 = vsel %vm213, %v206, 0
      %v221 = vsel %vm213, %v207, 0
      %v224 = vsel %vm213, %v208, 0
      %226 = vmatpush.msra.mxu0 0.0
      %227 = vmatpush.msra.mxu0 0.0
      %228 = vmatpush.msra.mxu0 0.0
      %229 = vmatpush.msra.mxu0 0.0
      %230 = vmatpush.msra.mxu0 0.0
      %231 = vmatpush.msra.mxu0 0.0
      %232 = vmatpush.msra.mxu0 0.0
      %233 = vmatpush.msra.mxu0 0.0
      %234 = vmatpush.msra.mxu0 0.0
      %235 = vmatpush.msra.mxu0 0.0
      %236 = vmatpush.msra.mxu0 0.0
      %237 = vmatpush.msra.mxu0 0.0
      %238 = vmatpush.msra.mxu0 0.0
      %239 = vmatpush.msra.mxu0 0.0
      %240 = vmatpush.msra.mxu0 %v184
      %241 = vmatpush.msra.mxu0 %v183
      %242 = vmatmul.f32.gmra.mxu0 %v215
      %v243 = vpop.f32.mrf.mxu0
      %v244 = vadd.f32 0.0, %v243
      %245 = vmatmul.f32.gmra.mxu0 %v218
      %v246 = vpop.f32.mrf.mxu0
      %v247 = vadd.f32 0.0, %v246
      %248 = vmatmul.f32.gmra.mxu0 %v221
      %v249 = vpop.f32.mrf.mxu0
      %v250 = vadd.f32 0.0, %v249
      %251 = vmatmul.f32.gmra.mxu0 %v224
      %v252 = vpop.f32.mrf.mxu0
      %v253 = vadd.f32 0.0, %v252
      %254 = vdwg.mxu0
      %v256 = vsel %vm213, %v209, 0
      %v259 = vsel %vm213, %v210, 0
      %v262 = vsel %vm213, %v211, 0
      %v265 = vsel %vm213, %v212, 0
      %267 = vmatpush.msra.mxu0 0.0
      %268 = vmatpush.msra.mxu0 0.0
      %269 = vmatpush.msra.mxu0 0.0
      %270 = vmatpush.msra.mxu0 0.0
      %271 = vmatpush.msra.mxu0 0.0
      %272 = vmatpush.msra.mxu0 0.0
      %273 = vmatpush.msra.mxu0 0.0
      %274 = vmatpush.msra.mxu0 0.0
      %275 = vmatpush.msra.mxu0 0.0
      %276 = vmatpush.msra.mxu0 0.0
      %277 = vmatpush.msra.mxu0 0.0
      %278 = vmatpush.msra.mxu0 0.0
      %279 = vmatpush.msra.mxu0 0.0
      %280 = vmatpush.msra.mxu0 0.0
      %281 = vmatpush.msra.mxu0 %v184
      %282 = vmatpush.msra.mxu0 %v183
      %283 = vmatmul.f32.gmra.mxu0 %v256
      %v284 = vpop.f32.mrf.mxu0
      %v285 = vadd.f32 0.0, %v284
      %286 = vmatmul.f32.gmra.mxu0 %v259
      %v287 = vpop.f32.mrf.mxu0
      %v288 = vadd.f32 0.0, %v287
      %289 = vmatmul.f32.gmra.mxu0 %v262
      %v290 = vpop.f32.mrf.mxu0
      %v291 = vadd.f32 0.0, %v290
      %292 = vmatmul.f32.gmra.mxu0 %v265
      %v293 = vpop.f32.mrf.mxu0
      %v294 = vadd.f32 0.0, %v293
      %295 = vdwg.mxu0
      %vm296 = vcmask 64512
      %297 = vst.msk [vmem:[%s181] sm:$0xff] %vm296, %v244
      %298 = vst.msk [vmem:[%s181 + $0x8] sm:$0xff] %vm296, %v247
      %299 = vst.msk [vmem:[%s181 + $0x10] sm:$0xff] %vm296, %v250
      %300 = vst.msk [vmem:[%s181 + $0x18] sm:$0xff] %vm296, %v253
      %305 = vrot.lane.b32.xlu0 %v244, 120
      %v306 = vpop.permute.xlu0 %305
      %307 = vrot.lane.b32.xlu0 %v247, 120
      %v308 = vpop.permute.xlu0 %307
      %309 = vrot.lane.b32.xlu0 %v250, 120
      %v310 = vpop.permute.xlu0 %309
      %311 = vrot.lane.b32.xlu0 %v253, 120
      %v312 = vpop.permute.xlu0 %311
      %s317 = scalar_lea.vmem %s181, 32
      %318 = vst.msk [vmem:[%s317] sm:$0xff] %vm296, %v306
      %319 = vst.msk [vmem:[%s317 + $0x8] sm:$0xff] %vm296, %v308
      %320 = vst.msk [vmem:[%s317 + $0x10] sm:$0xff] %vm296, %v310
      %321 = vst.msk [vmem:[%s317 + $0x18] sm:$0xff] %vm296, %v312
      %s322 = scalar_lea.vmem %s181, 64
      %323 = vst.msk [vmem:[%s322] sm:$0xff] %vm296, %v285
      %324 = vst.msk [vmem:[%s322 + $0x8] sm:$0xff] %vm296, %v288
      %325 = vst.msk [vmem:[%s322 + $0x10] sm:$0xff] %vm296, %v291
      %326 = vst.msk [vmem:[%s322 + $0x18] sm:$0xff] %vm296, %v294
      %331 = vrot.lane.b32.xlu0 %v285, 120
      %v332 = vpop.permute.xlu0 %331
      %333 = vrot.lane.b32.xlu0 %v288, 120
      %v334 = vpop.permute.xlu0 %333
      %335 = vrot.lane.b32.xlu0 %v291, 120
      %v336 = vpop.permute.xlu0 %335
      %337 = vrot.lane.b32.xlu0 %v294, 120
      %v338 = vpop.permute.xlu0 %337
      %s343 = scalar_lea.vmem %s181, 96
      %344 = vst.msk [vmem:[%s343] sm:$0xff] %vm296, %v332
      %345 = vst.msk [vmem:[%s343 + $0x8] sm:$0xff] %vm296, %v334
      %346 = vst.msk [vmem:[%s343 + $0x10] sm:$0xff] %vm296, %v336
      %347 = vst.msk [vmem:[%s343 + $0x18] sm:$0xff] %vm296, %v338
      %s348 = smul.u32 4, %s18
      %p349 = scmp.lt.s32.totalorder %s17, 1
      %s350 = scalar_select %p349, %s17, 1
      %p351 = scmp.lt.s32.totalorder %s348, 3
      %s352 = scalar_select %p351, %s348, 3
      %s353 = smul.addr %s350, 16
      %s354 = sadd.s32 %s352, %s353
      %s355 = smul.addr %s354, 8
      %s356 = scalar_lea.vmem %s2, %s355
      // Predicated region
      $region29: #{haar_wavelet_forward.1} parent=27 // pred_check
        %p357 = pneg %p94
      $region30: #{haar_wavelet_forward.1} parent=27 // pred_check_branch
        %359 = sbr.rel (%p357) target = $region32
      $region31: #{haar_wavelet_forward.1} parent=27 // pred_region
        %s360 = smul.u32 4, %s18
      $region32: #{haar_wavelet_forward.1} parent=27 // pred_fallthru
        _
    $region28: #{haar_wavelet_forward.1} parent=5 // pred_fallthru
      _
    %p361 = scmp.le.s32.totalorder 2, %s8
    // Predicated region
    $region33: #{haar_wavelet_forward.1} parent=5 // pred_check
      %p362 = pneg %p361
    $region34: #{haar_wavelet_forward.1} parent=5 // pred_check_branch
      %364 = sbr.rel (%p362) target = $region36
    $region35: #{haar_wavelet_forward.1} parent=5 // pred_region
      %s365 = ssub.s32 %s8, 2
      // Predicated region
      $region37: #{haar_wavelet_forward.1} parent=35 // pred_check
        %p366 = pneg %p100
      $region38: #{haar_wavelet_forward.1} parent=35 // pred_check_branch
        %368 = sbr.rel (%p366) target = $region40
      $region39: #{haar_wavelet_forward.1} parent=35 // pred_region
        %s369 = smul.u32 4, %s20
        %p370 = scmp.lt.s32.totalorder %s19, 1
        %s371 = scalar_select %p370, %s19, 1
        %p372 = scmp.lt.s32.totalorder %s369, 3
        %s373 = scalar_select %p372, %s369, 3
        %s374 = smul.addr %s371, 16
        %s375 = sadd.s32 %s373, %s374
        %s376 = smul.addr %s375, 8
        %s377 = scalar_lea.vmem %s2, %s376
      $region40: #{haar_wavelet_forward.1} parent=35 // pred_fallthru
        _
    $region36: #{haar_wavelet_forward.1} parent=5 // pred_fallthru
      _
  $region6: #{haar_wavelet_forward.1} parent=0 // loop_footer
    %s12 = sadd.s32 1, %s8
  $region7: #{haar_wavelet_forward.1} parent=0 // loop_footer_branch
    %7 = sbr.rel target = $region3
  $region8: #{haar_wavelet_forward.1} parent=0 // loop_exit
    _

</llo_original>
